<compile_context>
chip_gen: v6e
topology: v6e:2x2x1
jax: 0.10.0
libtpu: 0.0.40
codegen_flags: <defaults>
</compile_context>

<pallas_src>
import jax
import jax.numpy as jnp
from jax.experimental import pallas as pl
from jax.experimental.pallas import tpu as pltpu


def _make_kernel(n_enc: int, n_dec: int, B: int, T: int, D: int):
    """Build the kernel body for a fixed (n_enc, n_dec, B, T, D)."""

    def kernel(*refs):
        # --- unpack refs: x, encoder (w,b)*, K, decoder (w,b)*, Wf, bf, out ---
        x_ref = refs[0]
        idx = 1
        enc = []
        for _ in range(n_enc):
            enc.append((refs[idx], refs[idx + 1]))
            idx += 2
        K_ref = refs[idx]; idx += 1
        dec = []
        for _ in range(n_dec):
            dec.append((refs[idx], refs[idx + 1]))
            idx += 2
        Wf_ref, bf_ref = refs[idx], refs[idx + 1]; idx += 2
        out_ref = refs[idx]

        # ---- encoder MLP (ReLU between layers, not after the last) ----
        h = x_ref[...]                                    # (B, D)
        for li, (w, b) in enumerate(enc):
            h = jnp.dot(h, w[...], preferred_element_type=jnp.float32) + b[...]
            if li < n_enc - 1:
                h = jnp.maximum(h, 0.0)
        phi = h                                           # (B, latent)

        # ---- Koopman recurrence, fully unrolled (T is small & static) ----
        # phis[t] == encode(x) @ K**t, matching n_step_ahead(phi, t).
        K = K_ref[...]
        phis = [phi]
        for _ in range(1, T):
            phi = jnp.dot(phi, K, preferred_element_type=jnp.float32)
            phis.append(phi)
        # Stack t-major so the decoder runs once on all T*B rows.
        phi_stack = jnp.concatenate(phis, axis=0)         # (T*B, latent)

        # ---- decoder MLP + softplus + final linear, batched over all T ----
        h = phi_stack
        for li, (w, b) in enumerate(dec):
            h = jnp.dot(h, w[...], preferred_element_type=jnp.float32) + b[...]
            if li < n_dec - 1:
                h = jnp.maximum(h, 0.0)
        h = jax.nn.softplus(h)                            # EUP exp/log path
        h = jnp.dot(h, Wf_ref[...], preferred_element_type=jnp.float32) + bf_ref[...]
        # h: (T*B, D), t-major rows.  Scatter into the (B, T*D) output slab with
        # static sub-slice stores (lane-concatenated layout -> free reshape in
        # the wrapper, no transpose, single HBM writeback).
        for t in range(T):
            out_ref[:, t * D:(t + 1) * D] = h[t * B:(t + 1) * B, :].astype(out_ref.dtype)

    return kernel


def koopman_unmixer_forward(x, params, time_span):
    """x: (B, 1, input_dim) float32.  Returns (B, time_span-1, input_dim)."""
    enc_ws, enc_bs, K, dec_ws, dec_bs, Wf, bf = params
    B, one, D = x.shape
    assert one == 1
    assert time_span >= 2, "time_span must be >= 2 (forward emits time_span-1 steps)"
    T = time_span - 1
    x2 = x.reshape(B, D).astype(jnp.float32)

    inputs = [x2]
    for w, b in zip(enc_ws, enc_bs):
        inputs += [w, b.reshape(1, -1)]
    inputs += [K]
    for w, b in zip(dec_ws, dec_bs):
        inputs += [w, b.reshape(1, -1)]
    inputs += [Wf, bf.reshape(1, -1)]

    # Single kernel invocation: every operand is a full-array VMEM block,
    # loaded exactly once (no grid, no per-step DMA bookkeeping).
    in_specs = [pl.BlockSpec(memory_space=pltpu.MemorySpace.VMEM) for _ in inputs]
    out_specs = pl.BlockSpec(memory_space=pltpu.MemorySpace.VMEM)

    out = pl.pallas_call(
        _make_kernel(len(enc_ws), len(dec_ws), B, T, D),
        out_shape=jax.ShapeDtypeStruct((B, T * D), jnp.float32),
        in_specs=in_specs,
        out_specs=out_specs,
    )(*inputs)
    # (B, T*D) -> (B, T, D): pure metadata reshape, matches
    # torch.stack(predicted_states, dim=1).squeeze(2).
    return out.reshape(B, T, D)


def init_params(key, input_dim, linear_dims, nb_classes):
    """Deterministic parameter init mirroring the PyTorch module's shapes.
    Linear weights are stored pre-transposed, i.e. y = x @ W + b."""
    def lin(k, fan_in, fan_out):
        lim = 1.0 / float(fan_in) ** 0.5  # PyTorch nn.Linear default init range
        k1, k2 = jax.random.split(k)
        w = jax.random.uniform(k1, (fan_in, fan_out), jnp.float32, -lim, lim)
        b = jax.random.uniform(k2, (fan_out,), jnp.float32, -lim, lim)
        return w, b

    keys = jax.random.split(key, 16)
    ki = iter(range(16))

    # encoder: input_dim -> linear_dims[0] -> ... -> linear_dims[-1]
    enc_dims = [input_dim] + list(linear_dims)
    enc_ws, enc_bs = [], []
    for i in range(len(enc_dims) - 1):
        w, b = lin(keys[next(ki)], enc_dims[i], enc_dims[i + 1])
        enc_ws.append(w); enc_bs.append(b)

    # Koopman operator: identity per module __init__, plus a small deterministic
    # perturbation so that the time dimension is non-trivial in the test.
    latent = linear_dims[-1]
    K = jnp.eye(latent, dtype=jnp.float32) + 0.01 * jax.random.normal(
        keys[next(ki)], (latent, latent), jnp.float32)

    # decoder (double_decoder=True): linear_dims reversed, then -> nb_classes
    dec_dims = list(linear_dims)[::-1] + [nb_classes]
    dec_ws, dec_bs = [], []
    for i in range(len(dec_dims) - 1):
        w, b = lin(keys[next(ki)], dec_dims[i], dec_dims[i + 1])
        dec_ws.append(w); dec_bs.append(b)

    # final_layer: nb_classes -> input_dim
    Wf, bf = lin(keys[next(ki)], nb_classes, input_dim)
    return enc_ws, enc_bs, K, dec_ws, dec_bs, Wf, bf


def reference_forward(x, params, time_span):
    """Pure-JAX reference of KoopmanUnmixer.forward for correctness checking."""
    enc_ws, enc_bs, K, dec_ws, dec_bs, Wf, bf = params
    B, _, D = x.shape
    h = x.reshape(B, D)
    for i, (w, b) in enumerate(zip(enc_ws, enc_bs)):
        h = h @ w + b
        if i < len(enc_ws) - 1:
            h = jnp.maximum(h, 0.0)
    outs = []
    phi = h
    for t in range(time_span - 1):
        if t > 0:
            phi = phi @ K
        d = phi
        for i, (w, b) in enumerate(zip(dec_ws, dec_bs)):
            d = d @ w + b
            if i < len(dec_ws) - 1:
                d = jnp.maximum(d, 0.0)
        d = jax.nn.softplus(d)
        d = d @ Wf + bf
        outs.append(d)
    return jnp.stack(outs, axis=1)


if __name__ == "__main__":
    input_dim = 8
    linear_dims = [16, 32]
    nb_classes = 4
    batch = 8
    time_span = 6

    key = jax.random.PRNGKey(0)
    kx, kp = jax.random.split(key)
    x = jax.random.normal(kx, (batch, 1, input_dim), jnp.float32)
    params = init_params(kp, input_dim, linear_dims, nb_classes)

    out = koopman_unmixer_forward(x, params, time_span)
    out = jax.block_until_ready(out)

    ref = reference_forward(x, params, time_span)
    assert out.shape == (batch, time_span - 1, input_dim), out.shape
    assert jnp.allclose(out, ref, rtol=1e-4, atol=1e-4), float(
        jnp.max(jnp.abs(out - ref)))

    print("KERNEL_OK")
</pallas_src>

<mosaic_0001>
module attributes {stable_mosaic.version = 11 : i64} {
  func.func @kernel(%arg0: memref<8x8xf32, #tpu.memory_space<vmem>>, %arg1: memref<8x16xf32, #tpu.memory_space<vmem>>, %arg2: memref<1x16xf32, #tpu.memory_space<vmem>>, %arg3: memref<16x32xf32, #tpu.memory_space<vmem>>, %arg4: memref<1x32xf32, #tpu.memory_space<vmem>>, %arg5: memref<32x32xf32, #tpu.memory_space<vmem>>, %arg6: memref<32x16xf32, #tpu.memory_space<vmem>>, %arg7: memref<1x16xf32, #tpu.memory_space<vmem>>, %arg8: memref<16x4xf32, #tpu.memory_space<vmem>>, %arg9: memref<1x4xf32, #tpu.memory_space<vmem>>, %arg10: memref<4x8xf32, #tpu.memory_space<vmem>>, %arg11: memref<1x8xf32, #tpu.memory_space<vmem>>, %arg12: memref<8x40xf32, #tpu.memory_space<vmem>>) attributes {dimension_semantics = [], scalar_prefetch = 0 : i64, scratch_operands = 0 : i64, tpu.core_type = #tpu.core_type<tc>} {
    %c0 = arith.constant 0 : index
    %c0_0 = arith.constant 0 : index
    %0 = vector.load %arg0[%c0, %c0_0] : memref<8x8xf32, #tpu.memory_space<vmem>>, vector<8x8xf32>
    %c0_1 = arith.constant 0 : index
    %c0_2 = arith.constant 0 : index
    %1 = vector.load %arg1[%c0_1, %c0_2] : memref<8x16xf32, #tpu.memory_space<vmem>>, vector<8x16xf32>
    %cst = arith.constant dense<0.000000e+00> : vector<8x16xf32>
    %2 = tpu.matmul %0, %1, %cst {dimension_numbers = #tpu.dot_dimension_numbers<[1], [0], [0], [1], [0, 0, 1, 1], [], []>} : vector<8x8xf32>, vector<8x16xf32>, vector<8x16xf32> -> vector<8x16xf32>
    %c0_3 = arith.constant 0 : index
    %c0_4 = arith.constant 0 : index
    %3 = vector.load %arg2[%c0_3, %c0_4] : memref<1x16xf32, #tpu.memory_space<vmem>>, vector<1x16xf32>
    %4 = vector.broadcast %3 : vector<1x16xf32> to vector<8x16xf32>
    %5 = arith.addf %2, %4 : vector<8x16xf32>
    %cst_5 = arith.constant 0.000000e+00 : f32
    %6 = vector.broadcast %cst_5 : f32 to vector<8x16xf32>
    %7 = arith.maximumf %5, %6 : vector<8x16xf32>
    %c0_6 = arith.constant 0 : index
    %c0_7 = arith.constant 0 : index
    %8 = vector.load %arg3[%c0_6, %c0_7] : memref<16x32xf32, #tpu.memory_space<vmem>>, vector<16x32xf32>
    %cst_8 = arith.constant dense<0.000000e+00> : vector<8x32xf32>
    %9 = tpu.matmul %7, %8, %cst_8 {dimension_numbers = #tpu.dot_dimension_numbers<[1], [0], [0], [1], [0, 0, 1, 1], [], []>} : vector<8x16xf32>, vector<16x32xf32>, vector<8x32xf32> -> vector<8x32xf32>
    %c0_9 = arith.constant 0 : index
    %c0_10 = arith.constant 0 : index
    %10 = vector.load %arg4[%c0_9, %c0_10] : memref<1x32xf32, #tpu.memory_space<vmem>>, vector<1x32xf32>
    %11 = vector.broadcast %10 : vector<1x32xf32> to vector<8x32xf32>
    %12 = arith.addf %9, %11 : vector<8x32xf32>
    %c0_11 = arith.constant 0 : index
    %c0_12 = arith.constant 0 : index
    %13 = vector.load %arg5[%c0_11, %c0_12] : memref<32x32xf32, #tpu.memory_space<vmem>>, vector<32x32xf32>
    %cst_13 = arith.constant dense<0.000000e+00> : vector<8x32xf32>
    %14 = tpu.matmul %12, %13, %cst_13 {dimension_numbers = #tpu.dot_dimension_numbers<[1], [0], [0], [1], [0, 0, 1, 1], [], []>} : vector<8x32xf32>, vector<32x32xf32>, vector<8x32xf32> -> vector<8x32xf32>
    %cst_14 = arith.constant dense<0.000000e+00> : vector<8x32xf32>
    %15 = tpu.matmul %14, %13, %cst_14 {dimension_numbers = #tpu.dot_dimension_numbers<[1], [0], [0], [1], [0, 0, 1, 1], [], []>} : vector<8x32xf32>, vector<32x32xf32>, vector<8x32xf32> -> vector<8x32xf32>
    %cst_15 = arith.constant dense<0.000000e+00> : vector<8x32xf32>
    %16 = tpu.matmul %15, %13, %cst_15 {dimension_numbers = #tpu.dot_dimension_numbers<[1], [0], [0], [1], [0, 0, 1, 1], [], []>} : vector<8x32xf32>, vector<32x32xf32>, vector<8x32xf32> -> vector<8x32xf32>
    %cst_16 = arith.constant dense<0.000000e+00> : vector<8x32xf32>
    %17 = tpu.matmul %16, %13, %cst_16 {dimension_numbers = #tpu.dot_dimension_numbers<[1], [0], [0], [1], [0, 0, 1, 1], [], []>} : vector<8x32xf32>, vector<32x32xf32>, vector<8x32xf32> -> vector<8x32xf32>
    %18 = tpu.concatenate %12, %14, %15, %16, %17 in 0 : vector<8x32xf32>, vector<8x32xf32>, vector<8x32xf32>, vector<8x32xf32>, vector<8x32xf32> -> vector<40x32xf32>
    %c0_17 = arith.constant 0 : index
    %c0_18 = arith.constant 0 : index
    %19 = vector.load %arg6[%c0_17, %c0_18] : memref<32x16xf32, #tpu.memory_space<vmem>>, vector<32x16xf32>
    %cst_19 = arith.constant dense<0.000000e+00> : vector<40x16xf32>
    %20 = tpu.matmul %18, %19, %cst_19 {dimension_numbers = #tpu.dot_dimension_numbers<[1], [0], [0], [1], [0, 0, 1, 1], [], []>} : vector<40x32xf32>, vector<32x16xf32>, vector<40x16xf32> -> vector<40x16xf32>
    %c0_20 = arith.constant 0 : index
    %c0_21 = arith.constant 0 : index
    %21 = vector.load %arg7[%c0_20, %c0_21] : memref<1x16xf32, #tpu.memory_space<vmem>>, vector<1x16xf32>
    %22 = vector.broadcast %21 : vector<1x16xf32> to vector<40x16xf32>
    %23 = arith.addf %20, %22 : vector<40x16xf32>
    %cst_22 = arith.constant 0.000000e+00 : f32
    %24 = vector.broadcast %cst_22 : f32 to vector<40x16xf32>
    %25 = arith.maximumf %23, %24 : vector<40x16xf32>
    %c0_23 = arith.constant 0 : index
    %c0_24 = arith.constant 0 : index
    %26 = vector.load %arg8[%c0_23, %c0_24] : memref<16x4xf32, #tpu.memory_space<vmem>>, vector<16x4xf32>
    %cst_25 = arith.constant dense<0.000000e+00> : vector<40x4xf32>
    %27 = tpu.matmul %25, %26, %cst_25 {dimension_numbers = #tpu.dot_dimension_numbers<[1], [0], [0], [1], [0, 0, 1, 1], [], []>} : vector<40x16xf32>, vector<16x4xf32>, vector<40x4xf32> -> vector<40x4xf32>
    %c0_26 = arith.constant 0 : index
    %c0_27 = arith.constant 0 : index
    %28 = vector.load %arg9[%c0_26, %c0_27] : memref<1x4xf32, #tpu.memory_space<vmem>>, vector<1x4xf32>
    %29 = vector.broadcast %28 : vector<1x4xf32> to vector<40x4xf32>
    %30 = arith.addf %27, %29 : vector<40x4xf32>
    %cst_28 = arith.constant 0.000000e+00 : f32
    %31 = vector.broadcast %cst_28 : f32 to vector<40x4xf32>
    %32 = arith.maximumf %30, %31 : vector<40x4xf32>
    %33 = vector.broadcast %cst_28 : f32 to vector<40x4xf32>
    %34 = arith.subf %30, %33 : vector<40x4xf32>
    %35 = arith.cmpf one, %34, %34 : vector<40x4xf32>
    %36 = vector.broadcast %cst_28 : f32 to vector<40x4xf32>
    %37 = arith.addf %30, %36 : vector<40x4xf32>
    %38 = math.absf %34 : vector<40x4xf32>
    %cst_29 = arith.constant 0.000000e+00 : f32
    %39 = vector.broadcast %cst_29 : f32 to vector<40x4xf32>
    %40 = arith.subf %39, %38 : vector<40x4xf32>
    %41 = math.exp %40 : vector<40x4xf32>
    %42 = math.log1p %41 : vector<40x4xf32>
    %43 = arith.addf %32, %42 : vector<40x4xf32>
    %44 = arith.select %35, %37, %43 : vector<40x4xi1>, vector<40x4xf32>
    %c0_30 = arith.constant 0 : index
    %c0_31 = arith.constant 0 : index
    %45 = vector.load %arg10[%c0_30, %c0_31] : memref<4x8xf32, #tpu.memory_space<vmem>>, vector<4x8xf32>
    %cst_32 = arith.constant dense<0.000000e+00> : vector<40x8xf32>
    %46 = tpu.matmul %44, %45, %cst_32 {dimension_numbers = #tpu.dot_dimension_numbers<[1], [0], [0], [1], [0, 0, 1, 1], [], []>} : vector<40x4xf32>, vector<4x8xf32>, vector<40x8xf32> -> vector<40x8xf32>
    %c0_33 = arith.constant 0 : index
    %c0_34 = arith.constant 0 : index
    %47 = vector.load %arg11[%c0_33, %c0_34] : memref<1x8xf32, #tpu.memory_space<vmem>>, vector<1x8xf32>
    %48 = vector.broadcast %47 : vector<1x8xf32> to vector<40x8xf32>
    %49 = arith.addf %46, %48 : vector<40x8xf32>
    %50 = vector.extract_strided_slice %49 {offsets = [0, 0], sizes = [8, 8], strides = [1, 1]} : vector<40x8xf32> to vector<8x8xf32>
    %c0_35 = arith.constant 0 : index
    %c0_36 = arith.constant 0 : index
    %51 = vector.load %arg12[%c0_35, %c0_36] : memref<8x40xf32, #tpu.memory_space<vmem>>, vector<8x8xf32>
    tpu.vector_store %arg12[%c0_35, %c0_36], %50 {strides = array<i32>} : memref<8x40xf32, #tpu.memory_space<vmem>>, vector<8x8xf32>,
    %52 = vector.extract_strided_slice %49 {offsets = [8, 0], sizes = [8, 8], strides = [1, 1]} : vector<40x8xf32> to vector<8x8xf32>
    %c0_37 = arith.constant 0 : index
    %c8 = arith.constant 8 : index
    %53 = vector.load %arg12[%c0_37, %c8] : memref<8x40xf32, #tpu.memory_space<vmem>>, vector<8x8xf32>
    tpu.vector_store %arg12[%c0_37, %c8], %52 {strides = array<i32>} : memref<8x40xf32, #tpu.memory_space<vmem>>, vector<8x8xf32>,
    %54 = vector.extract_strided_slice %49 {offsets = [16, 0], sizes = [8, 8], strides = [1, 1]} : vector<40x8xf32> to vector<8x8xf32>
    %c0_38 = arith.constant 0 : index
    %c16 = arith.constant 16 : index
    %55 = vector.load %arg12[%c0_38, %c16] : memref<8x40xf32, #tpu.memory_space<vmem>>, vector<8x8xf32>
    tpu.vector_store %arg12[%c0_38, %c16], %54 {strides = array<i32>} : memref<8x40xf32, #tpu.memory_space<vmem>>, vector<8x8xf32>,
    %56 = vector.extract_strided_slice %49 {offsets = [24, 0], sizes = [8, 8], strides = [1, 1]} : vector<40x8xf32> to vector<8x8xf32>
    %c0_39 = arith.constant 0 : index
    %c24 = arith.constant 24 : index
    %57 = vector.load %arg12[%c0_39, %c24] : memref<8x40xf32, #tpu.memory_space<vmem>>, vector<8x8xf32>
    tpu.vector_store %arg12[%c0_39, %c24], %56 {strides = array<i32>} : memref<8x40xf32, #tpu.memory_space<vmem>>, vector<8x8xf32>,
    %58 = vector.extract_strided_slice %49 {offsets = [32, 0], sizes = [8, 8], strides = [1, 1]} : vector<40x8xf32> to vector<8x8xf32>
    %c0_40 = arith.constant 0 : index
    %c32 = arith.constant 32 : index
    %59 = vector.load %arg12[%c0_40, %c32] : memref<8x40xf32, #tpu.memory_space<vmem>>, vector<8x8xf32>
    tpu.vector_store %arg12[%c0_40, %c32], %58 {strides = array<i32>} : memref<8x40xf32, #tpu.memory_space<vmem>>, vector<8x8xf32>,
    return
  }
}

</mosaic_0001>

<llo_original>
// kernel: tpu_custom_call.1
$region0: #{tpu_custom_call.1}
  #allocation0 [shape = 'u32[]', space=smem, size = 0x4, offset = 0x4, fixed_abs, tag = 'smem constant byte address 0x4 - core index']
  #allocation1 [shape = 'u32[144,128]{1,0:T(1,128)}', space=vmem, size = 0x12000, scoped, tag = 'internal scratch']
  %s0 = inlined_call_operand.vmem [shape: f32[8,8], index: 0, kind: input, shape index: {}]
  %s1 = inlined_call_operand.hbm [shape: f32[8,16], index: 1, kind: input, shape index: {}]
  %s2 = inlined_call_operand.hbm [shape: f32[1,16], index: 2, kind: input, shape index: {}]
  %s3 = inlined_call_operand.vmem [shape: f32[16,32], index: 3, kind: input, shape index: {}]
  %s4 = inlined_call_operand.hbm [shape: f32[1,32], index: 4, kind: input, shape index: {}]
  %s5 = inlined_call_operand.vmem [shape: f32[32,32], index: 5, kind: input, shape index: {}]
  %s6 = inlined_call_operand.vmem [shape: f32[32,16], index: 6, kind: input, shape index: {}]
  %s7 = inlined_call_operand.hbm [shape: f32[1,16], index: 7, kind: input, shape index: {}]
  %s8 = inlined_call_operand.vmem [shape: f32[16,4], index: 8, kind: input, shape index: {}]
  %s9 = inlined_call_operand.vmem [shape: f32[1,4], index: 9, kind: input, shape index: {}]
  %s10 = inlined_call_operand.vmem [shape: f32[4,8], index: 10, kind: input, shape index: {}]
  %s11 = inlined_call_operand.vmem [shape: f32[1,8], index: 11, kind: input, shape index: {}]
  %s12 = inlined_call_operand.hbm [shape: f32[8,40], index: 12, kind: output, shape index: {}]
  %s13 = sld [smem:[#allocation0]]
  $region74: #{tpu_custom_call.1} parent=0
    _
  %s15 = ssub.s32 1, %s13
  %s16 = scalar_select 0, %s15, %s13
  $region1: #{tpu_custom_call.1} parent=0
    #allocation2 [shape = 'u8[4096]{0}', space=vmem, size = 0x1000, scoped, tag = 'input window, operand 1, single buffered']
    #allocation3 [shape = 's32[1]{0}', space=sflag, size = 0x4, scoped, tag = 'scoped memory for tpu_custom_call.1']
    #allocation4 [shape = 's32[1]{0}', space=sflag, size = 0x4, scoped, tag = 'scoped memory for tpu_custom_call.1']
    #allocation5 [shape = 'u8[512]{0}', space=vmem, size = 0x400, scoped, tag = 'input window, operand 2, single buffered']
    #allocation6 [shape = 's32[1]{0}', space=sflag, size = 0x4, scoped, tag = 'scoped memory for tpu_custom_call.1']
    #allocation7 [shape = 'u8[512]{0}', space=vmem, size = 0x400, scoped, tag = 'input window, operand 4, single buffered']
    #allocation8 [shape = 'u8[512]{0}', space=vmem, size = 0x400, scoped, tag = 'input window, operand 7, single buffered']
    #allocation9 [shape = 's32[1]{0}', space=sflag, size = 0x4, scoped, tag = 'scoped memory for tpu_custom_call.1']
    #allocation10 [shape = 'u8[4096]{0}', space=vmem, size = 0x1000, scoped, tag = 'output window, operand 0, single buffered']
    %17 = vsyncpa [#allocation3], 0
    %18 = vsyncpa [#allocation6], 0
    %19 = vsyncpa [#allocation9], 0
    %20 = vsyncpa [#allocation4], 0
    // Predicated region
    $region2: #{tpu_custom_call.1} parent=1 // pred_check
      _
    $region3: #{tpu_custom_call.1} parent=1 // pred_check_branch
      %22 = sbr.rel (0) target = $region5
    $region4: #{tpu_custom_call.1} parent=1 // pred_region
      _
    $region5: #{tpu_custom_call.1} parent=1 // pred_fallthru
      _
    // Predicated region
    $region6: #{tpu_custom_call.1} parent=1 // pred_check
      _
    $region7: #{tpu_custom_call.1} parent=1 // pred_check_branch
      %24 = sbr.rel (0) target = $region9
    $region8: #{tpu_custom_call.1} parent=1 // pred_region
      %s26 = ssub.s32 128, 128
      %27 = vsyncadd [#allocation3], %s26
      %s29 = sshll.u32 [#allocation2], 4
      %s30 = int_to_ptr.vmem [resolvable:$true] %s29
      %32 = dma.hbm_to_vmem [thread:$0]  %s1, 128, %s30, [#allocation3]
    $region9: #{tpu_custom_call.1} parent=1 // pred_fallthru
      _
    // Predicated region
    $region10: #{tpu_custom_call.1} parent=1 // pred_check
      _
    $region11: #{tpu_custom_call.1} parent=1 // pred_check_branch
      %34 = sbr.rel (0) target = $region13
    $region12: #{tpu_custom_call.1} parent=1 // pred_region
      %s36 = ssub.s32 16, 16
      %37 = vsyncadd [#allocation6], %s36
      %s39 = sshll.u32 [#allocation5], 4
      %s40 = int_to_ptr.vmem [resolvable:$true] %s39
      %42 = dma.hbm_to_vmem [thread:$0]  %s2, 16, %s40, [#allocation6]
    $region13: #{tpu_custom_call.1} parent=1 // pred_fallthru
      _
    // Predicated region
    $region14: #{tpu_custom_call.1} parent=1 // pred_check
      _
    $region15: #{tpu_custom_call.1} parent=1 // pred_check_branch
      %44 = sbr.rel (0) target = $region17
    $region16: #{tpu_custom_call.1} parent=1 // pred_region
      _
    $region17: #{tpu_custom_call.1} parent=1 // pred_fallthru
      _
    // Predicated region
    $region18: #{tpu_custom_call.1} parent=1 // pred_check
      _
    $region19: #{tpu_custom_call.1} parent=1 // pred_check_branch
      %46 = sbr.rel (0) target = $region21
    $region20: #{tpu_custom_call.1} parent=1 // pred_region
      %s48 = ssub.s32 16, 16
      %49 = vsyncadd [#allocation6], %s48
      %s51 = sshll.u32 [#allocation7], 4
      %s52 = int_to_ptr.vmem [resolvable:$true] %s51
      %54 = dma.hbm_to_vmem [thread:$0]  %s4, 16, %s52, [#allocation6]
    $region21: #{tpu_custom_call.1} parent=1 // pred_fallthru
      _
    // Predicated region
    $region22: #{tpu_custom_call.1} parent=1 // pred_check
      _
    $region23: #{tpu_custom_call.1} parent=1 // pred_check_branch
      %56 = sbr.rel (0) target = $region25
    $region24: #{tpu_custom_call.1} parent=1 // pred_region
      _
    $region25: #{tpu_custom_call.1} parent=1 // pred_fallthru
      _
    // Predicated region
    $region26: #{tpu_custom_call.1} parent=1 // pred_check
      _
    $region27: #{tpu_custom_call.1} parent=1 // pred_check_branch
      %58 = sbr.rel (0) target = $region29
    $region28: #{tpu_custom_call.1} parent=1 // pred_region
      _
    $region29: #{tpu_custom_call.1} parent=1 // pred_fallthru
      _
    // Predicated region
    $region30: #{tpu_custom_call.1} parent=1 // pred_check
      _
    $region31: #{tpu_custom_call.1} parent=1 // pred_check_branch
      %60 = sbr.rel (0) target = $region33
    $region32: #{tpu_custom_call.1} parent=1 // pred_region
      %s62 = ssub.s32 16, 16
      %63 = vsyncadd [#allocation9], %s62
      %s65 = sshll.u32 [#allocation8], 4
      %s66 = int_to_ptr.vmem [resolvable:$true] %s65
      %68 = dma.hbm_to_vmem [thread:$0]  %s7, 16, %s66, [#allocation9]
    $region33: #{tpu_custom_call.1} parent=1 // pred_fallthru
      _
    // Predicated region
    $region34: #{tpu_custom_call.1} parent=1 // pred_check
      _
    $region35: #{tpu_custom_call.1} parent=1 // pred_check_branch
      %70 = sbr.rel (0) target = $region37
    $region36: #{tpu_custom_call.1} parent=1 // pred_region
      _
    $region37: #{tpu_custom_call.1} parent=1 // pred_fallthru
      _
    // Predicated region
    $region38: #{tpu_custom_call.1} parent=1 // pred_check
      _
    $region39: #{tpu_custom_call.1} parent=1 // pred_check_branch
      %72 = sbr.rel (0) target = $region41
    $region40: #{tpu_custom_call.1} parent=1 // pred_region
      _
    $region41: #{tpu_custom_call.1} parent=1 // pred_fallthru
      _
    // Predicated region
    $region42: #{tpu_custom_call.1} parent=1 // pred_check
      _
    $region43: #{tpu_custom_call.1} parent=1 // pred_check_branch
      %74 = sbr.rel (0) target = $region45
    $region44: #{tpu_custom_call.1} parent=1 // pred_region
      _
    $region45: #{tpu_custom_call.1} parent=1 // pred_fallthru
      _
    // Predicated region
    $region46: #{tpu_custom_call.1} parent=1 // pred_check
      _
    $region47: #{tpu_custom_call.1} parent=1 // pred_check_branch
      %76 = sbr.rel (0) target = $region49
    $region48: #{tpu_custom_call.1} parent=1 // pred_region
      _
    $region49: #{tpu_custom_call.1} parent=1 // pred_fallthru
      _
    // Predicated region
    $region50: #{tpu_custom_call.1} parent=1 // pred_check
      _
    $region51: #{tpu_custom_call.1} parent=1 // pred_check_branch
      %78 = sbr.rel (0) target = $region53
    $region52: #{tpu_custom_call.1} parent=1 // pred_region
      %79 = dma.done [#allocation3], 128
    $region53: #{tpu_custom_call.1} parent=1 // pred_fallthru
      _
    // Predicated region
    $region54: #{tpu_custom_call.1} parent=1 // pred_check
      _
    $region55: #{tpu_custom_call.1} parent=1 // pred_check_branch
      %81 = sbr.rel (0) target = $region57
    $region56: #{tpu_custom_call.1} parent=1 // pred_region
      %82 = dma.done [#allocation6], 16
    $region57: #{tpu_custom_call.1} parent=1 // pred_fallthru
      _
    // Predicated region
    $region58: #{tpu_custom_call.1} parent=1 // pred_check
      _
    $region59: #{tpu_custom_call.1} parent=1 // pred_check_branch
      %84 = sbr.rel (0) target = $region61
    $region60: #{tpu_custom_call.1} parent=1 // pred_region
      %85 = dma.done [#allocation6], 16
    $region61: #{tpu_custom_call.1} parent=1 // pred_fallthru
      _
    // Predicated region
    $region62: #{tpu_custom_call.1} parent=1 // pred_check
      _
    $region63: #{tpu_custom_call.1} parent=1 // pred_check_branch
      %87 = sbr.rel (0) target = $region65
    $region64: #{tpu_custom_call.1} parent=1 // pred_region
      %88 = dma.done [#allocation9], 16
    $region65: #{tpu_custom_call.1} parent=1 // pred_fallthru
      _
    %v89 = vld [vmem:[%s0] sm:$0xff]
    %v90 = vld [vmem:[#allocation2] sm:$0xff]
    %v91 = vld [vmem:[#allocation5] sm:$0x1]
    %v93 = vlaneseq
    %v94 = vshrl.u32 %v93, 7
    %v95 = vsub.s32 0, %v94
    %v96 = vrot.slane %v91, %v95
    %vm98 = vcmask 64512
    %v100 = vsel %vm98, %v89, 0
    %102 = vmatprep.subr.mxu0 0.0
    %103 = vmatpush1.msra.mxu0 0.0
    %104 = vmatprep.subr.mxu0 0.0
    %105 = vmatpush1.msra.mxu0 0.0
    %106 = vmatprep.subr.mxu0 0.0
    %107 = vmatpush1.msra.mxu0 0.0
    %108 = vmatprep.subr.mxu0 0.0
    %109 = vmatpush1.msra.mxu0 0.0
    %110 = vmatprep.subr.mxu0 0.0
    %111 = vmatpush1.msra.mxu0 0.0
    %112 = vmatprep.subr.mxu0 0.0
    %113 = vmatpush1.msra.mxu0 0.0
    %114 = vmatprep.subr.mxu0 0.0
    %115 = vmatpush1.msra.mxu0 0.0
    %116 = vmatprep.subr.mxu0 0.0
    %117 = vmatpush1.msra.mxu0 0.0
    %118 = vmatprep.subr.mxu0 0.0
    %119 = vmatpush1.msra.mxu0 0.0
    %120 = vmatprep.subr.mxu0 0.0
    %121 = vmatpush1.msra.mxu0 0.0
    %122 = vmatprep.subr.mxu0 0.0
    %123 = vmatpush1.msra.mxu0 0.0
    %124 = vmatprep.subr.mxu0 0.0
    %125 = vmatpush1.msra.mxu0 0.0
    %126 = vmatprep.subr.mxu0 0.0
    %127 = vmatpush1.msra.mxu0 0.0
    %128 = vmatprep.subr.mxu0 0.0
    %129 = vmatpush1.msra.mxu0 0.0
    %130 = vmatprep.subr.mxu0 0.0
    %131 = vmatpush1.msra.mxu0 0.0
    %132 = vmatprep.subr.mxu0 0.0
    %133 = vmatpush1.msra.mxu0 %v90
    %134 = vmatprep.subr.mxu0 0.0
    %135 = vmatpush2.msra.mxu0 0.0
    %136 = vmatprep.subr.mxu0 0.0
    %137 = vmatpush2.msra.mxu0 0.0
    %138 = vmatprep.subr.mxu0 0.0
    %139 = vmatpush2.msra.mxu0 0.0
    %140 = vmatprep.subr.mxu0 0.0
    %141 = vmatpush2.msra.mxu0 0.0
    %142 = vmatprep.subr.mxu0 0.0
    %143 = vmatpush2.msra.mxu0 0.0
    %144 = vmatprep.subr.mxu0 0.0
    %145 = vmatpush2.msra.mxu0 0.0
    %146 = vmatprep.subr.mxu0 0.0
    %147 = vmatpush2.msra.mxu0 0.0
    %148 = vmatprep.subr.mxu0 0.0
    %149 = vmatpush2.msra.mxu0 0.0
    %150 = vmatprep.subr.mxu0 0.0
    %151 = vmatpush2.msra.mxu0 0.0
    %152 = vmatprep.subr.mxu0 0.0
    %153 = vmatpush2.msra.mxu0 0.0
    %154 = vmatprep.subr.mxu0 0.0
    %155 = vmatpush2.msra.mxu0 0.0
    %156 = vmatprep.subr.mxu0 0.0
    %157 = vmatpush2.msra.mxu0 0.0
    %158 = vmatprep.subr.mxu0 0.0
    %159 = vmatpush2.msra.mxu0 0.0
    %160 = vmatprep.subr.mxu0 0.0
    %161 = vmatpush2.msra.mxu0 0.0
    %162 = vmatprep.subr.mxu0 0.0
    %163 = vmatpush2.msra.mxu0 0.0
    %164 = vmatprep.subr.mxu0 0.0
    %165 = vmatpush2.msra.mxu0 0.0
    %166 = vmatprep.mubr.f32.mxu0 0.0
    %167 = vmatmul.mubr.f32.gmra.mxu0 %v100
    %v168 = vpop.f32.mrf.mxu0
    %v169 = vadd.f32 %v96, %v168
    %v170 = vpop.f32.mrf.mxu0
    %171 = vdwg.mxu0
    %v172 = vmax.f32 %v169, 0.0
    %v173 = vld [vmem:[%s3] sm:$0xff]
    %v174 = vld [vmem:[%s3 + $0x8] sm:$0xff]
    %v175 = vld [vmem:[#allocation7] sm:$0x1]
    %v177 = vlaneseq
    %v178 = vshrl.u32 %v177, 7
    %v179 = vsub.s32 0, %v178
    %v180 = vrot.slane %v175, %v179
    %vm182 = vcmask 130048
    %v184 = vsel %vm182, %v172, 0
    %186 = vmatprep.subr.mxu0 0.0
    %187 = vmatpush1.msra.mxu0 0.0
    %188 = vmatprep.subr.mxu0 0.0
    %189 = vmatpush1.msra.mxu0 0.0
    %190 = vmatprep.subr.mxu0 0.0
    %191 = vmatpush1.msra.mxu0 0.0
    %192 = vmatprep.subr.mxu0 0.0
    %193 = vmatpush1.msra.mxu0 0.0
    %194 = vmatprep.subr.mxu0 0.0
    %195 = vmatpush1.msra.mxu0 0.0
    %196 = vmatprep.subr.mxu0 0.0
    %197 = vmatpush1.msra.mxu0 0.0
    %198 = vmatprep.subr.mxu0 0.0
    %199 = vmatpush1.msra.mxu0 0.0
    %200 = vmatprep.subr.mxu0 0.0
    %201 = vmatpush1.msra.mxu0 0.0
    %202 = vmatprep.subr.mxu0 0.0
    %203 = vmatpush1.msra.mxu0 0.0
    %204 = vmatprep.subr.mxu0 0.0
    %205 = vmatpush1.msra.mxu0 0.0
    %206 = vmatprep.subr.mxu0 0.0
    %207 = vmatpush1.msra.mxu0 0.0
    %208 = vmatprep.subr.mxu0 0.0
    %209 = vmatpush1.msra.mxu0 0.0
    %210 = vmatprep.subr.mxu0 0.0
    %211 = vmatpush1.msra.mxu0 0.0
    %212 = vmatprep.subr.mxu0 0.0
    %213 = vmatpush1.msra.mxu0 0.0
    %214 = vmatprep.subr.mxu0 0.0
    %215 = vmatpush1.msra.mxu0 %v174
    %216 = vmatprep.subr.mxu0 0.0
    %217 = vmatpush1.msra.mxu0 %v173
    %218 = vmatprep.subr.mxu0 0.0
    %219 = vmatpush2.msra.mxu0 0.0
    %220 = vmatprep.subr.mxu0 0.0
    %221 = vmatpush2.msra.mxu0 0.0
    %222 = vmatprep.subr.mxu0 0.0
    %223 = vmatpush2.msra.mxu0 0.0
    %224 = vmatprep.subr.mxu0 0.0
    %225 = vmatpush2.msra.mxu0 0.0
    %226 = vmatprep.subr.mxu0 0.0
    %227 = vmatpush2.msra.mxu0 0.0
    %228 = vmatprep.subr.mxu0 0.0
    %229 = vmatpush2.msra.mxu0 0.0
    %230 = vmatprep.subr.mxu0 0.0
    %231 = vmatpush2.msra.mxu0 0.0
    %232 = vmatprep.subr.mxu0 0.0
    %233 = vmatpush2.msra.mxu0 0.0
    %234 = vmatprep.subr.mxu0 0.0
    %235 = vmatpush2.msra.mxu0 0.0
    %236 = vmatprep.subr.mxu0 0.0
    %237 = vmatpush2.msra.mxu0 0.0
    %238 = vmatprep.subr.mxu0 0.0
    %239 = vmatpush2.msra.mxu0 0.0
    %240 = vmatprep.subr.mxu0 0.0
    %241 = vmatpush2.msra.mxu0 0.0
    %242 = vmatprep.subr.mxu0 0.0
    %243 = vmatpush2.msra.mxu0 0.0
    %244 = vmatprep.subr.mxu0 0.0
    %245 = vmatpush2.msra.mxu0 0.0
    %246 = vmatprep.subr.mxu0 0.0
    %247 = vmatpush2.msra.mxu0 0.0
    %248 = vmatprep.subr.mxu0 0.0
    %249 = vmatpush2.msra.mxu0 0.0
    %250 = vmatprep.mubr.f32.mxu0 0.0
    %251 = vmatmul.mubr.f32.gmra.mxu0 %v184
    %v252 = vpop.f32.mrf.mxu0
    %v253 = vadd.f32 %v180, %v252
    %v254 = vpop.f32.mrf.mxu0
    %255 = vdwg.mxu0
    %v256 = vld [vmem:[%s5] sm:$0xff]
    %v257 = vld [vmem:[%s5 + $0x8] sm:$0xff]
    %v258 = vld [vmem:[%s5 + $0x10] sm:$0xff]
    %v259 = vld [vmem:[%s5 + $0x18] sm:$0xff]
    %vm260 = vcmask 261120
    %v262 = vsel %vm260, %v253, 0
    %264 = vmatprep.subr.mxu0 0.0
    %265 = vmatpush1.msra.mxu0 0.0
    %266 = vmatprep.subr.mxu0 0.0
    %267 = vmatpush1.msra.mxu0 0.0
    %268 = vmatprep.subr.mxu0 0.0
    %269 = vmatpush1.msra.mxu0 0.0
    %270 = vmatprep.subr.mxu0 0.0
    %271 = vmatpush1.msra.mxu0 0.0
    %272 = vmatprep.subr.mxu0 0.0
    %273 = vmatpush1.msra.mxu0 0.0
    %274 = vmatprep.subr.mxu0 0.0
    %275 = vmatpush1.msra.mxu0 0.0
    %276 = vmatprep.subr.mxu0 0.0
    %277 = vmatpush1.msra.mxu0 0.0
    %278 = vmatprep.subr.mxu0 0.0
    %279 = vmatpush1.msra.mxu0 0.0
    %280 = vmatprep.subr.mxu0 0.0
    %281 = vmatpush1.msra.mxu0 0.0
    %282 = vmatprep.subr.mxu0 0.0
    %283 = vmatpush1.msra.mxu0 0.0
    %284 = vmatprep.subr.mxu0 0.0
    %285 = vmatpush1.msra.mxu0 0.0
    %286 = vmatprep.subr.mxu0 0.0
    %287 = vmatpush1.msra.mxu0 0.0
    %288 = vmatprep.subr.mxu0 0.0
    %289 = vmatpush1.msra.mxu0 %v259
    %290 = vmatprep.subr.mxu0 0.0
    %291 = vmatpush1.msra.mxu0 %v258
    %292 = vmatprep.subr.mxu0 0.0
    %293 = vmatpush1.msra.mxu0 %v257
    %294 = vmatprep.subr.mxu0 0.0
    %295 = vmatpush1.msra.mxu0 %v256
    %296 = vmatprep.subr.mxu0 0.0
    %297 = vmatpush2.msra.mxu0 0.0
    %298 = vmatprep.subr.mxu0 0.0
    %299 = vmatpush2.msra.mxu0 0.0
    %300 = vmatprep.subr.mxu0 0.0
    %301 = vmatpush2.msra.mxu0 0.0
    %302 = vmatprep.subr.mxu0 0.0
    %303 = vmatpush2.msra.mxu0 0.0
    %304 = vmatprep.subr.mxu0 0.0
    %305 = vmatpush2.msra.mxu0 0.0
    %306 = vmatprep.subr.mxu0 0.0
    %307 = vmatpush2.msra.mxu0 0.0
    %308 = vmatprep.subr.mxu0 0.0
    %309 = vmatpush2.msra.mxu0 0.0
    %310 = vmatprep.subr.mxu0 0.0
    %311 = vmatpush2.msra.mxu0 0.0
    %312 = vmatprep.subr.mxu0 0.0
    %313 = vmatpush2.msra.mxu0 0.0
    %314 = vmatprep.subr.mxu0 0.0
    %315 = vmatpush2.msra.mxu0 0.0
    %316 = vmatprep.subr.mxu0 0.0
    %317 = vmatpush2.msra.mxu0 0.0
    %318 = vmatprep.subr.mxu0 0.0
    %319 = vmatpush2.msra.mxu0 0.0
    %320 = vmatprep.subr.mxu0 0.0
    %321 = vmatpush2.msra.mxu0 0.0
    %322 = vmatprep.subr.mxu0 0.0
    %323 = vmatpush2.msra.mxu0 0.0
    %324 = vmatprep.subr.mxu0 0.0
    %325 = vmatpush2.msra.mxu0 0.0
    %326 = vmatprep.subr.mxu0 0.0
    %327 = vmatpush2.msra.mxu0 0.0
    %328 = vmatprep.mubr.f32.mxu0 0.0
    %329 = vmatmul.mubr.f32.gmra.mxu0 %v262
    %v330 = vpop.f32.mrf.mxu0
    %v331 = vadd.f32 0.0, %v330
    %v332 = vpop.f32.mrf.mxu0
    %333 = vdwg.mxu0
    %v335 = vsel %vm260, %v331, 0
    %337 = vmatprep.subr.mxu0 0.0
    %338 = vmatpush1.msra.mxu0 0.0
    %339 = vmatprep.subr.mxu0 0.0
    %340 = vmatpush1.msra.mxu0 0.0
    %341 = vmatprep.subr.mxu0 0.0
    %342 = vmatpush1.msra.mxu0 0.0
    %343 = vmatprep.subr.mxu0 0.0
    %344 = vmatpush1.msra.mxu0 0.0
    %345 = vmatprep.subr.mxu0 0.0
    %346 = vmatpush1.msra.mxu0 0.0
    %347 = vmatprep.subr.mxu0 0.0
    %348 = vmatpush1.msra.mxu0 0.0
    %349 = vmatprep.subr.mxu0 0.0
    %350 = vmatpush1.msra.mxu0 0.0
    %351 = vmatprep.subr.mxu0 0.0
    %352 = vmatpush1.msra.mxu0 0.0
    %353 = vmatprep.subr.mxu0 0.0
    %354 = vmatpush1.msra.mxu0 0.0
    %355 = vmatprep.subr.mxu0 0.0
    %356 = vmatpush1.msra.mxu0 0.0
    %357 = vmatprep.subr.mxu0 0.0
    %358 = vmatpush1.msra.mxu0 0.0
    %359 = vmatprep.subr.mxu0 0.0
    %360 = vmatpush1.msra.mxu0 0.0
    %361 = vmatprep.subr.mxu0 0.0
    %362 = vmatpush1.msra.mxu0 %v259
    %363 = vmatprep.subr.mxu0 0.0
    %364 = vmatpush1.msra.mxu0 %v258
    %365 = vmatprep.subr.mxu0 0.0
    %366 = vmatpush1.msra.mxu0 %v257
    %367 = vmatprep.subr.mxu0 0.0
    %368 = vmatpush1.msra.mxu0 %v256
    %369 = vmatprep.subr.mxu0 0.0
    %370 = vmatpush2.msra.mxu0 0.0
    %371 = vmatprep.subr.mxu0 0.0
    %372 = vmatpush2.msra.mxu0 0.0
    %373 = vmatprep.subr.mxu0 0.0
    %374 = vmatpush2.msra.mxu0 0.0
    %375 = vmatprep.subr.mxu0 0.0
    %376 = vmatpush2.msra.mxu0 0.0
    %377 = vmatprep.subr.mxu0 0.0
    %378 = vmatpush2.msra.mxu0 0.0
    %379 = vmatprep.subr.mxu0 0.0
    %380 = vmatpush2.msra.mxu0 0.0
    %381 = vmatprep.subr.mxu0 0.0
    %382 = vmatpush2.msra.mxu0 0.0
    %383 = vmatprep.subr.mxu0 0.0
    %384 = vmatpush2.msra.mxu0 0.0
    %385 = vmatprep.subr.mxu0 0.0
    %386 = vmatpush2.msra.mxu0 0.0
    %387 = vmatprep.subr.mxu0 0.0
    %388 = vmatpush2.msra.mxu0 0.0
    %389 = vmatprep.subr.mxu0 0.0
    %390 = vmatpush2.msra.mxu0 0.0
    %391 = vmatprep.subr.mxu0 0.0
    %392 = vmatpush2.msra.mxu0 0.0
    %393 = vmatprep.subr.mxu0 0.0
    %394 = vmatpush2.msra.mxu0 0.0
    %395 = vmatprep.subr.mxu0 0.0
    %396 = vmatpush2.msra.mxu0 0.0
    %397 = vmatprep.subr.mxu0 0.0
    %398 = vmatpush2.msra.mxu0 0.0
    %399 = vmatprep.subr.mxu0 0.0
    %400 = vmatpush2.msra.mxu0 0.0
    %401 = vmatprep.mubr.f32.mxu0 0.0
    %402 = vmatmul.mubr.f32.gmra.mxu0 %v335
    %v403 = vpop.f32.mrf.mxu0
    %v404 = vadd.f32 0.0, %v403
    %v405 = vpop.f32.mrf.mxu0
    %406 = vdwg.mxu0
    %v408 = vsel %vm260, %v404, 0
    %410 = vmatprep.subr.mxu0 0.0
    %411 = vmatpush1.msra.mxu0 0.0
    %412 = vmatprep.subr.mxu0 0.0
    %413 = vmatpush1.msra.mxu0 0.0
    %414 = vmatprep.subr.mxu0 0.0
    %415 = vmatpush1.msra.mxu0 0.0
    %416 = vmatprep.subr.mxu0 0.0
    %417 = vmatpush1.msra.mxu0 0.0
    %418 = vmatprep.subr.mxu0 0.0
    %419 = vmatpush1.msra.mxu0 0.0
    %420 = vmatprep.subr.mxu0 0.0
    %421 = vmatpush1.msra.mxu0 0.0
    %422 = vmatprep.subr.mxu0 0.0
    %423 = vmatpush1.msra.mxu0 0.0
    %424 = vmatprep.subr.mxu0 0.0
    %425 = vmatpush1.msra.mxu0 0.0
    %426 = vmatprep.subr.mxu0 0.0
    %427 = vmatpush1.msra.mxu0 0.0
    %428 = vmatprep.subr.mxu0 0.0
    %429 = vmatpush1.msra.mxu0 0.0
    %430 = vmatprep.subr.mxu0 0.0
    %431 = vmatpush1.msra.mxu0 0.0
    %432 = vmatprep.subr.mxu0 0.0
    %433 = vmatpush1.msra.mxu0 0.0
    %434 = vmatprep.subr.mxu0 0.0
    %435 = vmatpush1.msra.mxu0 %v259
    %436 = vmatprep.subr.mxu0 0.0
    %437 = vmatpush1.msra.mxu0 %v258
    %438 = vmatprep.subr.mxu0 0.0
    %439 = vmatpush1.msra.mxu0 %v257
    %440 = vmatprep.subr.mxu0 0.0
    %441 = vmatpush1.msra.mxu0 %v256
    %442 = vmatprep.subr.mxu0 0.0
    %443 = vmatpush2.msra.mxu0 0.0
    %444 = vmatprep.subr.mxu0 0.0
    %445 = vmatpush2.msra.mxu0 0.0
    %446 = vmatprep.subr.mxu0 0.0
    %447 = vmatpush2.msra.mxu0 0.0
    %448 = vmatprep.subr.mxu0 0.0
    %449 = vmatpush2.msra.mxu0 0.0
    %450 = vmatprep.subr.mxu0 0.0
    %451 = vmatpush2.msra.mxu0 0.0
    %452 = vmatprep.subr.mxu0 0.0
    %453 = vmatpush2.msra.mxu0 0.0
    %454 = vmatprep.subr.mxu0 0.0
    %455 = vmatpush2.msra.mxu0 0.0
    %456 = vmatprep.subr.mxu0 0.0
    %457 = vmatpush2.msra.mxu0 0.0
    %458 = vmatprep.subr.mxu0 0.0
    %459 = vmatpush2.msra.mxu0 0.0
    %460 = vmatprep.subr.mxu0 0.0
    %461 = vmatpush2.msra.mxu0 0.0
    %462 = vmatprep.subr.mxu0 0.0
    %463 = vmatpush2.msra.mxu0 0.0
    %464 = vmatprep.subr.mxu0 0.0
    %465 = vmatpush2.msra.mxu0 0.0
    %466 = vmatprep.subr.mxu0 0.0
    %467 = vmatpush2.msra.mxu0 0.0
    %468 = vmatprep.subr.mxu0 0.0
    %469 = vmatpush2.msra.mxu0 0.0
    %470 = vmatprep.subr.mxu0 0.0
    %471 = vmatpush2.msra.mxu0 0.0
    %472 = vmatprep.subr.mxu0 0.0
    %473 = vmatpush2.msra.mxu0 0.0
    %474 = vmatprep.mubr.f32.mxu0 0.0
    %475 = vmatmul.mubr.f32.gmra.mxu0 %v408
    %v476 = vpop.f32.mrf.mxu0
    %v477 = vadd.f32 0.0, %v476
    %v478 = vpop.f32.mrf.mxu0
    %479 = vdwg.mxu0
    %v481 = vsel %vm260, %v477, 0
    %483 = vmatprep.subr.mxu0 0.0
    %484 = vmatpush1.msra.mxu0 0.0
    %485 = vmatprep.subr.mxu0 0.0
    %486 = vmatpush1.msra.mxu0 0.0
    %487 = vmatprep.subr.mxu0 0.0
    %488 = vmatpush1.msra.mxu0 0.0
    %489 = vmatprep.subr.mxu0 0.0
    %490 = vmatpush1.msra.mxu0 0.0
    %491 = vmatprep.subr.mxu0 0.0
    %492 = vmatpush1.msra.mxu0 0.0
    %493 = vmatprep.subr.mxu0 0.0
    %494 = vmatpush1.msra.mxu0 0.0
    %495 = vmatprep.subr.mxu0 0.0
    %496 = vmatpush1.msra.mxu0 0.0
    %497 = vmatprep.subr.mxu0 0.0
    %498 = vmatpush1.msra.mxu0 0.0
    %499 = vmatprep.subr.mxu0 0.0
    %500 = vmatpush1.msra.mxu0 0.0
    %501 = vmatprep.subr.mxu0 0.0
    %502 = vmatpush1.msra.mxu0 0.0
    %503 = vmatprep.subr.mxu0 0.0
    %504 = vmatpush1.msra.mxu0 0.0
    %505 = vmatprep.subr.mxu0 0.0
    %506 = vmatpush1.msra.mxu0 0.0
    %507 = vmatprep.subr.mxu0 0.0
    %508 = vmatpush1.msra.mxu0 %v259
    %509 = vmatprep.subr.mxu0 0.0
    %510 = vmatpush1.msra.mxu0 %v258
    %511 = vmatprep.subr.mxu0 0.0
    %512 = vmatpush1.msra.mxu0 %v257
    %513 = vmatprep.subr.mxu0 0.0
    %514 = vmatpush1.msra.mxu0 %v256
    %515 = vmatprep.subr.mxu0 0.0
    %516 = vmatpush2.msra.mxu0 0.0
    %517 = vmatprep.subr.mxu0 0.0
    %518 = vmatpush2.msra.mxu0 0.0
    %519 = vmatprep.subr.mxu0 0.0
    %520 = vmatpush2.msra.mxu0 0.0
    %521 = vmatprep.subr.mxu0 0.0
    %522 = vmatpush2.msra.mxu0 0.0
    %523 = vmatprep.subr.mxu0 0.0
    %524 = vmatpush2.msra.mxu0 0.0
    %525 = vmatprep.subr.mxu0 0.0
    %526 = vmatpush2.msra.mxu0 0.0
    %527 = vmatprep.subr.mxu0 0.0
    %528 = vmatpush2.msra.mxu0 0.0
    %529 = vmatprep.subr.mxu0 0.0
    %530 = vmatpush2.msra.mxu0 0.0
    %531 = vmatprep.subr.mxu0 0.0
    %532 = vmatpush2.msra.mxu0 0.0
    %533 = vmatprep.subr.mxu0 0.0
    %534 = vmatpush2.msra.mxu0 0.0
    %535 = vmatprep.subr.mxu0 0.0
    %536 = vmatpush2.msra.mxu0 0.0
    %537 = vmatprep.subr.mxu0 0.0
    %538 = vmatpush2.msra.mxu0 0.0
    %539 = vmatprep.subr.mxu0 0.0
    %540 = vmatpush2.msra.mxu0 0.0
    %541 = vmatprep.subr.mxu0 0.0
    %542 = vmatpush2.msra.mxu0 0.0
    %543 = vmatprep.subr.mxu0 0.0
    %544 = vmatpush2.msra.mxu0 0.0
    %545 = vmatprep.subr.mxu0 0.0
    %546 = vmatpush2.msra.mxu0 0.0
    %547 = vmatprep.mubr.f32.mxu0 0.0
    %548 = vmatmul.mubr.f32.gmra.mxu0 %v481
    %v549 = vpop.f32.mrf.mxu0
    %v550 = vadd.f32 0.0, %v549
    %v551 = vpop.f32.mrf.mxu0
    %552 = vdwg.mxu0
    %v553 = vld [vmem:[%s6] sm:$0xff]
    %v554 = vld [vmem:[%s6 + $0x8] sm:$0xff]
    %v555 = vld [vmem:[%s6 + $0x10] sm:$0xff]
    %v556 = vld [vmem:[%s6 + $0x18] sm:$0xff]
    %v557 = vld [vmem:[#allocation8] sm:$0x1]
    %v559 = vlaneseq
    %v560 = vshrl.u32 %v559, 7
    %v561 = vsub.s32 0, %v560
    %v562 = vrot.slane %v557, %v561
    %v565 = vsel %vm260, %v550, 0
    %567 = vmatprep.subr.mxu0 0.0
    %568 = vmatpush1.msra.mxu0 0.0
    %569 = vmatprep.subr.mxu0 0.0
    %570 = vmatpush1.msra.mxu0 0.0
    %571 = vmatprep.subr.mxu0 0.0
    %572 = vmatpush1.msra.mxu0 0.0
    %573 = vmatprep.subr.mxu0 0.0
    %574 = vmatpush1.msra.mxu0 0.0
    %575 = vmatprep.subr.mxu0 0.0
    %576 = vmatpush1.msra.mxu0 0.0
    %577 = vmatprep.subr.mxu0 0.0
    %578 = vmatpush1.msra.mxu0 0.0
    %579 = vmatprep.subr.mxu0 0.0
    %580 = vmatpush1.msra.mxu0 0.0
    %581 = vmatprep.subr.mxu0 0.0
    %582 = vmatpush1.msra.mxu0 0.0
    %583 = vmatprep.subr.mxu0 0.0
    %584 = vmatpush1.msra.mxu0 0.0
    %585 = vmatprep.subr.mxu0 0.0
    %586 = vmatpush1.msra.mxu0 0.0
    %587 = vmatprep.subr.mxu0 0.0
    %588 = vmatpush1.msra.mxu0 0.0
    %589 = vmatprep.subr.mxu0 0.0
    %590 = vmatpush1.msra.mxu0 0.0
    %591 = vmatprep.subr.mxu0 0.0
    %592 = vmatpush1.msra.mxu0 %v556
    %593 = vmatprep.subr.mxu0 0.0
    %594 = vmatpush1.msra.mxu0 %v555
    %595 = vmatprep.subr.mxu0 0.0
    %596 = vmatpush1.msra.mxu0 %v554
    %597 = vmatprep.subr.mxu0 0.0
    %598 = vmatpush1.msra.mxu0 %v553
    %599 = vmatprep.subr.mxu0 0.0
    %600 = vmatpush2.msra.mxu0 0.0
    %601 = vmatprep.subr.mxu0 0.0
    %602 = vmatpush2.msra.mxu0 0.0
    %603 = vmatprep.subr.mxu0 0.0
    %604 = vmatpush2.msra.mxu0 0.0
    %605 = vmatprep.subr.mxu0 0.0
    %606 = vmatpush2.msra.mxu0 0.0
    %607 = vmatprep.subr.mxu0 0.0
    %608 = vmatpush2.msra.mxu0 0.0
    %609 = vmatprep.subr.mxu0 0.0
    %610 = vmatpush2.msra.mxu0 0.0
    %611 = vmatprep.subr.mxu0 0.0
    %612 = vmatpush2.msra.mxu0 0.0
    %613 = vmatprep.subr.mxu0 0.0
    %614 = vmatpush2.msra.mxu0 0.0
    %615 = vmatprep.subr.mxu0 0.0
    %616 = vmatpush2.msra.mxu0 0.0
    %617 = vmatprep.subr.mxu0 0.0
    %618 = vmatpush2.msra.mxu0 0.0
    %619 = vmatprep.subr.mxu0 0.0
    %620 = vmatpush2.msra.mxu0 0.0
    %621 = vmatprep.subr.mxu0 0.0
    %622 = vmatpush2.msra.mxu0 0.0
    %623 = vmatprep.subr.mxu0 0.0
    %624 = vmatpush2.msra.mxu0 0.0
    %625 = vmatprep.subr.mxu0 0.0
    %626 = vmatpush2.msra.mxu0 0.0
    %627 = vmatprep.subr.mxu0 0.0
    %628 = vmatpush2.msra.mxu0 0.0
    %629 = vmatprep.subr.mxu0 0.0
    %630 = vmatpush2.msra.mxu0 0.0
    %631 = vmatprep.mubr.f32.mxu0 0.0
    %632 = vmatmul.mubr.f32.gmra.mxu0 %v262
    %v633 = vpop.f32.mrf.mxu0
    %v634 = vadd.f32 %v562, %v633
    %v635 = vpop.f32.mrf.mxu0
    %636 = vmatprep.mubr.f32.mxu0 0.0
    %637 = vmatmul.mubr.f32.gmra.mxu0 %v335
    %v638 = vpop.f32.mrf.mxu0
    %v639 = vadd.f32 %v562, %v638
    %v640 = vpop.f32.mrf.mxu0
    %641 = vmatprep.mubr.f32.mxu0 0.0
    %642 = vmatmul.mubr.f32.gmra.mxu0 %v408
    %v643 = vpop.f32.mrf.mxu0
    %v644 = vadd.f32 %v562, %v643
    %v645 = vpop.f32.mrf.mxu0
    %646 = vmatprep.mubr.f32.mxu0 0.0
    %647 = vmatmul.mubr.f32.gmra.mxu0 %v481
    %v648 = vpop.f32.mrf.mxu0
    %v649 = vadd.f32 %v562, %v648
    %v650 = vpop.f32.mrf.mxu0
    %651 = vmatprep.mubr.f32.mxu0 0.0
    %652 = vmatmul.mubr.f32.gmra.mxu0 %v565
    %v653 = vpop.f32.mrf.mxu0
    %v654 = vadd.f32 %v562, %v653
    %v655 = vpop.f32.mrf.mxu0
    %656 = vdwg.mxu0
    %v657 = vmax.f32 %v634, 0.0
    %v658 = vmax.f32 %v639, 0.0
    %v659 = vmax.f32 %v644, 0.0
    %v660 = vmax.f32 %v649, 0.0
    %v661 = vmax.f32 %v654, 0.0
    %v662 = vld [vmem:[%s8] sm:$0xff]
    %v663 = vld [vmem:[%s8 + $0x8] sm:$0xff]
    %v664 = vld [vmem:[%s9] sm:$0x1]
    %v666 = vlaneseq
    %v667 = vshrl.u32 %v666, 7
    %v668 = vsub.s32 0, %v667
    %v669 = vrot.slane %v664, %v668
    %v672 = vsel %vm182, %v657, 0
    %v675 = vsel %vm182, %v658, 0
    %v678 = vsel %vm182, %v659, 0
    %v681 = vsel %vm182, %v660, 0
    %v684 = vsel %vm182, %v661, 0
    %686 = vmatprep.subr.mxu0 0.0
    %687 = vmatpush1.msra.mxu0 0.0
    %688 = vmatprep.subr.mxu0 0.0
    %689 = vmatpush1.msra.mxu0 0.0
    %690 = vmatprep.subr.mxu0 0.0
    %691 = vmatpush1.msra.mxu0 0.0
    %692 = vmatprep.subr.mxu0 0.0
    %693 = vmatpush1.msra.mxu0 0.0
    %694 = vmatprep.subr.mxu0 0.0
    %695 = vmatpush1.msra.mxu0 0.0
    %696 = vmatprep.subr.mxu0 0.0
    %697 = vmatpush1.msra.mxu0 0.0
    %698 = vmatprep.subr.mxu0 0.0
    %699 = vmatpush1.msra.mxu0 0.0
    %700 = vmatprep.subr.mxu0 0.0
    %701 = vmatpush1.msra.mxu0 0.0
    %702 = vmatprep.subr.mxu0 0.0
    %703 = vmatpush1.msra.mxu0 0.0
    %704 = vmatprep.subr.mxu0 0.0
    %705 = vmatpush1.msra.mxu0 0.0
    %706 = vmatprep.subr.mxu0 0.0
    %707 = vmatpush1.msra.mxu0 0.0
    %708 = vmatprep.subr.mxu0 0.0
    %709 = vmatpush1.msra.mxu0 0.0
    %710 = vmatprep.subr.mxu0 0.0
    %711 = vmatpush1.msra.mxu0 0.0
    %712 = vmatprep.subr.mxu0 0.0
    %713 = vmatpush1.msra.mxu0 0.0
    %714 = vmatprep.subr.mxu0 0.0
    %715 = vmatpush1.msra.mxu0 %v663
    %716 = vmatprep.subr.mxu0 0.0
    %717 = vmatpush1.msra.mxu0 %v662
    %718 = vmatprep.subr.mxu0 0.0
    %719 = vmatpush2.msra.mxu0 0.0
    %720 = vmatprep.subr.mxu0 0.0
    %721 = vmatpush2.msra.mxu0 0.0
    %722 = vmatprep.subr.mxu0 0.0
    %723 = vmatpush2.msra.mxu0 0.0
    %724 = vmatprep.subr.mxu0 0.0
    %725 = vmatpush2.msra.mxu0 0.0
    %726 = vmatprep.subr.mxu0 0.0
    %727 = vmatpush2.msra.mxu0 0.0
    %728 = vmatprep.subr.mxu0 0.0
    %729 = vmatpush2.msra.mxu0 0.0
    %730 = vmatprep.subr.mxu0 0.0
    %731 = vmatpush2.msra.mxu0 0.0
    %732 = vmatprep.subr.mxu0 0.0
    %733 = vmatpush2.msra.mxu0 0.0
    %734 = vmatprep.subr.mxu0 0.0
    %735 = vmatpush2.msra.mxu0 0.0
    %736 = vmatprep.subr.mxu0 0.0
    %737 = vmatpush2.msra.mxu0 0.0
    %738 = vmatprep.subr.mxu0 0.0
    %739 = vmatpush2.msra.mxu0 0.0
    %740 = vmatprep.subr.mxu0 0.0
    %741 = vmatpush2.msra.mxu0 0.0
    %742 = vmatprep.subr.mxu0 0.0
    %743 = vmatpush2.msra.mxu0 0.0
    %744 = vmatprep.subr.mxu0 0.0
    %745 = vmatpush2.msra.mxu0 0.0
    %746 = vmatprep.subr.mxu0 0.0
    %747 = vmatpush2.msra.mxu0 0.0
    %748 = vmatprep.subr.mxu0 0.0
    %749 = vmatpush2.msra.mxu0 0.0
    %750 = vmatprep.mubr.f32.mxu0 0.0
    %751 = vmatmul.mubr.f32.gmra.mxu0 %v672
    %v752 = vpop.f32.mrf.mxu0
    %v753 = vadd.f32 %v669, %v752
    %v754 = vpop.f32.mrf.mxu0
    %755 = vmatprep.mubr.f32.mxu0 0.0
    %756 = vmatmul.mubr.f32.gmra.mxu0 %v675
    %v757 = vpop.f32.mrf.mxu0
    %v758 = vadd.f32 %v669, %v757
    %v759 = vpop.f32.mrf.mxu0
    %760 = vmatprep.mubr.f32.mxu0 0.0
    %761 = vmatmul.mubr.f32.gmra.mxu0 %v678
    %v762 = vpop.f32.mrf.mxu0
    %v763 = vadd.f32 %v669, %v762
    %v764 = vpop.f32.mrf.mxu0
    %765 = vmatprep.mubr.f32.mxu0 0.0
    %766 = vmatmul.mubr.f32.gmra.mxu0 %v681
    %v767 = vpop.f32.mrf.mxu0
    %v768 = vadd.f32 %v669, %v767
    %v769 = vpop.f32.mrf.mxu0
    %770 = vmatprep.mubr.f32.mxu0 0.0
    %771 = vmatmul.mubr.f32.gmra.mxu0 %v684
    %v772 = vpop.f32.mrf.mxu0
    %v773 = vadd.f32 %v669, %v772
    %v774 = vpop.f32.mrf.mxu0
    %775 = vdwg.mxu0
    %v776 = vmax.f32 %v753, 0.0
    %v777 = vmax.f32 %v758, 0.0
    %v778 = vmax.f32 %v763, 0.0
    %v779 = vmax.f32 %v768, 0.0
    %v780 = vmax.f32 %v773, 0.0
    %vm781 = vcmp.ne.f32.partialorder %v753, %v753
    %vm782 = vcmp.ne.f32.partialorder %v758, %v758
    %vm783 = vcmp.ne.f32.partialorder %v763, %v763
    %vm784 = vcmp.ne.f32.partialorder %v768, %v768
    %vm785 = vcmp.ne.f32.partialorder %v773, %v773
    %v786 = vadd.f32 %v753, 0.0
    %v787 = vadd.f32 %v758, 0.0
    %v788 = vadd.f32 %v763, 0.0
    %v789 = vadd.f32 %v768, 0.0
    %v790 = vadd.f32 %v773, 0.0
    %v791 = vand.u32 2147483647, %v753
    %v792 = vand.u32 2147483647, %v758
    %v793 = vand.u32 2147483647, %v763
    %v794 = vand.u32 2147483647, %v768
    %v795 = vand.u32 2147483647, %v773
    %v796 = vsub.f32 0.0, %v791
    %v797 = vsub.f32 0.0, %v792
    %v798 = vsub.f32 0.0, %v793
    %v799 = vsub.f32 0.0, %v794
    %v800 = vsub.f32 0.0, %v795
    %v801 = vmul.f32 %v796, 1.442695
    %v802 = vpow.pop %v801
    %v803 = vmul.f32 %v797, 1.442695
    %v804 = vpow.pop %v803
    %v805 = vmul.f32 %v798, 1.442695
    %v806 = vpow.pop %v805
    %v807 = vmul.f32 %v799, 1.442695
    %v808 = vpow.pop %v807
    %v809 = vmul.f32 %v800, 1.442695
    %v810 = vpow.pop %v809
    %v811 = vadd.f32 %v802, 1.0
    %v812 = vlog2.pop %v811
    %v813 = vmul.f32 %v812, 0.6931472
    %v814 = vmul.f32 -0.5, %v802
    %v815 = vadd.f32 %v814, 1.0
    %v816 = vmul.f32 %v815, %v802
    %v817 = vand.u32 2147483647, %v802
    %vm818 = vcmp.lt.f32.partialorder %v817, 0.0004427343
    %v819 = vsel %vm818, %v816, %v813
    %v820 = vadd.f32 %v804, 1.0
    %v821 = vlog2.pop %v820
    %v822 = vmul.f32 %v821, 0.6931472
    %v823 = vmul.f32 -0.5, %v804
    %v824 = vadd.f32 %v823, 1.0
    %v825 = vmul.f32 %v824, %v804
    %v826 = vand.u32 2147483647, %v804
    %vm827 = vcmp.lt.f32.partialorder %v826, 0.0004427343
    %v828 = vsel %vm827, %v825, %v822
    %v829 = vadd.f32 %v806, 1.0
    %v830 = vlog2.pop %v829
    %v831 = vmul.f32 %v830, 0.6931472
    %v832 = vmul.f32 -0.5, %v806
    %v833 = vadd.f32 %v832, 1.0
    %v834 = vmul.f32 %v833, %v806
    %v835 = vand.u32 2147483647, %v806
    %vm836 = vcmp.lt.f32.partialorder %v835, 0.0004427343
    %v837 = vsel %vm836, %v834, %v831
    %v838 = vadd.f32 %v808, 1.0
    %v839 = vlog2.pop %v838
    %v840 = vmul.f32 %v839, 0.6931472
    %v841 = vmul.f32 -0.5, %v808
    %v842 = vadd.f32 %v841, 1.0
    %v843 = vmul.f32 %v842, %v808
    %v844 = vand.u32 2147483647, %v808
    %vm845 = vcmp.lt.f32.partialorder %v844, 0.0004427343
    %v846 = vsel %vm845, %v843, %v840
    %v847 = vadd.f32 %v810, 1.0
    %v848 = vlog2.pop %v847
    %v849 = vmul.f32 %v848, 0.6931472
    %v850 = vmul.f32 -0.5, %v810
    %v851 = vadd.f32 %v850, 1.0
    %v852 = vmul.f32 %v851, %v810
    %v853 = vand.u32 2147483647, %v810
    %vm854 = vcmp.lt.f32.partialorder %v853, 0.0004427343
    %v855 = vsel %vm854, %v852, %v849
    %v856 = vadd.f32 %v776, %v819
    %v857 = vadd.f32 %v777, %v828
    %v858 = vadd.f32 %v778, %v837
    %v859 = vadd.f32 %v779, %v846
    %v860 = vadd.f32 %v780, %v855
    %v861 = vsel %vm781, %v786, %v856
    %v862 = vsel %vm782, %v787, %v857
    %v863 = vsel %vm783, %v788, %v858
    %v864 = vsel %vm784, %v789, %v859
    %v865 = vsel %vm785, %v790, %v860
    %v866 = vld [vmem:[%s10] sm:$0xf]
    %v867 = vld [vmem:[%s11] sm:$0x1]
    %v869 = vlaneseq
    %v870 = vshrl.u32 %v869, 7
    %v871 = vsub.s32 0, %v870
    %v872 = vrot.slane %v867, %v871
    %vm874 = vcmask 31744
    %v876 = vsel %vm874, %v861, 0
    %v879 = vsel %vm874, %v862, 0
    %v882 = vsel %vm874, %v863, 0
    %v885 = vsel %vm874, %v864, 0
    %v888 = vsel %vm874, %v865, 0
    %vm890 = vcmask 1043456
    %v892 = vsel %vm890, %v866, 0
    %894 = vmatprep.subr.mxu0 0.0
    %895 = vmatpush1.msra.mxu0 0.0
    %896 = vmatprep.subr.mxu0 0.0
    %897 = vmatpush1.msra.mxu0 0.0
    %898 = vmatprep.subr.mxu0 0.0
    %899 = vmatpush1.msra.mxu0 0.0
    %900 = vmatprep.subr.mxu0 0.0
    %901 = vmatpush1.msra.mxu0 0.0
    %902 = vmatprep.subr.mxu0 0.0
    %903 = vmatpush1.msra.mxu0 0.0
    %904 = vmatprep.subr.mxu0 0.0
    %905 = vmatpush1.msra.mxu0 0.0
    %906 = vmatprep.subr.mxu0 0.0
    %907 = vmatpush1.msra.mxu0 0.0
    %908 = vmatprep.subr.mxu0 0.0
    %909 = vmatpush1.msra.mxu0 0.0
    %910 = vmatprep.subr.mxu0 0.0
    %911 = vmatpush1.msra.mxu0 0.0
    %912 = vmatprep.subr.mxu0 0.0
    %913 = vmatpush1.msra.mxu0 0.0
    %914 = vmatprep.subr.mxu0 0.0
    %915 = vmatpush1.msra.mxu0 0.0
    %916 = vmatprep.subr.mxu0 0.0
    %917 = vmatpush1.msra.mxu0 0.0
    %918 = vmatprep.subr.mxu0 0.0
    %919 = vmatpush1.msra.mxu0 0.0
    %920 = vmatprep.subr.mxu0 0.0
    %921 = vmatpush1.msra.mxu0 0.0
    %922 = vmatprep.subr.mxu0 0.0
    %923 = vmatpush1.msra.mxu0 0.0
    %924 = vmatprep.subr.mxu0 0.0
    %925 = vmatpush1.msra.mxu0 %v892
    %926 = vmatprep.subr.mxu0 0.0
    %927 = vmatpush2.msra.mxu0 0.0
    %928 = vmatprep.subr.mxu0 0.0
    %929 = vmatpush2.msra.mxu0 0.0
    %930 = vmatprep.subr.mxu0 0.0
    %931 = vmatpush2.msra.mxu0 0.0
    %932 = vmatprep.subr.mxu0 0.0
    %933 = vmatpush2.msra.mxu0 0.0
    %934 = vmatprep.subr.mxu0 0.0
    %935 = vmatpush2.msra.mxu0 0.0
    %936 = vmatprep.subr.mxu0 0.0
    %937 = vmatpush2.msra.mxu0 0.0
    %938 = vmatprep.subr.mxu0 0.0
    %939 = vmatpush2.msra.mxu0 0.0
    %940 = vmatprep.subr.mxu0 0.0
    %941 = vmatpush2.msra.mxu0 0.0
    %942 = vmatprep.subr.mxu0 0.0
    %943 = vmatpush2.msra.mxu0 0.0
    %944 = vmatprep.subr.mxu0 0.0
    %945 = vmatpush2.msra.mxu0 0.0
    %946 = vmatprep.subr.mxu0 0.0
    %947 = vmatpush2.msra.mxu0 0.0
    %948 = vmatprep.subr.mxu0 0.0
    %949 = vmatpush2.msra.mxu0 0.0
    %950 = vmatprep.subr.mxu0 0.0
    %951 = vmatpush2.msra.mxu0 0.0
    %952 = vmatprep.subr.mxu0 0.0
    %953 = vmatpush2.msra.mxu0 0.0
    %954 = vmatprep.subr.mxu0 0.0
    %955 = vmatpush2.msra.mxu0 0.0
    %956 = vmatprep.subr.mxu0 0.0
    %957 = vmatpush2.msra.mxu0 0.0
    %958 = vmatprep.mubr.f32.mxu0 0.0
    %959 = vmatmul.mubr.f32.gmra.mxu0 %v876
    %v960 = vpop.f32.mrf.mxu0
    %v961 = vadd.f32 %v872, %v960
    %v962 = vpop.f32.mrf.mxu0
    %963 = vmatprep.mubr.f32.mxu0 0.0
    %964 = vmatmul.mubr.f32.gmra.mxu0 %v879
    %v965 = vpop.f32.mrf.mxu0
    %v966 = vadd.f32 %v872, %v965
    %v967 = vpop.f32.mrf.mxu0
    %968 = vmatprep.mubr.f32.mxu0 0.0
    %969 = vmatmul.mubr.f32.gmra.mxu0 %v882
    %v970 = vpop.f32.mrf.mxu0
    %v971 = vadd.f32 %v872, %v970
    %v972 = vpop.f32.mrf.mxu0
    %973 = vmatprep.mubr.f32.mxu0 0.0
    %974 = vmatmul.mubr.f32.gmra.mxu0 %v885
    %v975 = vpop.f32.mrf.mxu0
    %v976 = vadd.f32 %v872, %v975
    %v977 = vpop.f32.mrf.mxu0
    %978 = vmatprep.mubr.f32.mxu0 0.0
    %979 = vmatmul.mubr.f32.gmra.mxu0 %v888
    %v980 = vpop.f32.mrf.mxu0
    %v981 = vadd.f32 %v872, %v980
    %v982 = vpop.f32.mrf.mxu0
    %983 = vdwg.mxu0
    %984 = vst.msk [vmem:[#allocation10] sm:$0xff] %vm98, %v961
    %986 = vrot.lane.b32.xlu0 %v966, 8
    %v987 = vpop.permute.xlu0 %986
    %vm989 = vcmask 130112
    %990 = vst.msk [vmem:[#allocation10] sm:$0xff] %vm989, %v987
    %992 = vrot.lane.b32.xlu0 %v971, 16
    %v993 = vpop.permute.xlu0 %992
    %vm995 = vcmask 195712
    %996 = vst.msk [vmem:[#allocation10] sm:$0xff] %vm995, %v993
    %998 = vrot.lane.b32.xlu0 %v976, 24
    %v999 = vpop.permute.xlu0 %998
    %vm1001 = vcmask 261312
    %1002 = vst.msk [vmem:[#allocation10] sm:$0xff] %vm1001, %v999
    %1004 = vrot.lane.b32.xlu0 %v981, 32
    %v1005 = vpop.permute.xlu0 %1004
    %vm1007 = vcmask 326912
    %1008 = vst.msk [vmem:[#allocation10] sm:$0xff] %vm1007, %v1005
    // Predicated region
    $region66: #{tpu_custom_call.1} parent=1 // pred_check
      _
    $region67: #{tpu_custom_call.1} parent=1 // pred_check_branch
      %1010 = sbr.rel (0) target = $region69
    $region68: #{tpu_custom_call.1} parent=1 // pred_region
      %s1012 = ssub.s32 128, 128
      %1013 = vsyncadd [#allocation4], %s1012
      %s1015 = sshll.u32 [#allocation10], 4
      %s1016 = int_to_ptr.vmem [resolvable:$true] %s1015
      %1018 = dma.vmem_to_hbm [thread:$0]  %s1016, 128, %s12, [#allocation4]
    $region69: #{tpu_custom_call.1} parent=1 // pred_fallthru
      _
    // Predicated region
    $region70: #{tpu_custom_call.1} parent=1 // pred_check
      _
    $region71: #{tpu_custom_call.1} parent=1 // pred_check_branch
      %1020 = sbr.rel (0) target = $region73
    $region72: #{tpu_custom_call.1} parent=1 // pred_region
      %1021 = dma.done [#allocation4], 128
    $region73: #{tpu_custom_call.1} parent=1 // pred_fallthru
      _
    %1022 = vsyncpa [#allocation3], 1
    %1023 = vsyncpa [#allocation6], 1
    %1024 = vsyncpa [#allocation9], 1
    %1025 = vsyncpa [#allocation4], 1

</llo_original>
